<compile_context>
chip_gen: v5e
topology: v5e:2x2
jax: 0.10.0
libtpu: 0.0.40
codegen_flags: <defaults>
</compile_context>

<pallas_src>
import jax
import jax.numpy as jnp
from jax.experimental import pallas as pl
from jax.experimental.pallas import tpu as pltpu


def _sstanh_kernel(s_ref, x_ref, o_ref):
    # s_ref: SMEM (1,) f32 learned scale.  x_ref/o_ref: lane-dense VMEM tiles.
    t = jnp.tanh(x_ref[...])
    o_ref[...] = (t + s_ref[0] * t).astype(o_ref.dtype)


# ----------------------------- chip detection ------------------------------


def _device_kind() -> str:
    try:
        return jax.devices()[0].device_kind.lower()
    except Exception:
        return ""


def _block_bytes_and_vmem_limit():
    kind = _device_kind()
    if "v7" in kind:
        # 3.2 TB/s HBM: bigger blocks amortize the ~0.35us/step overhead;
        # 64 MiB physical VMEM -> keep 2x2 buffers (~32 MiB) under a 48 MiB cap.
        return 8 * 1024 * 1024, 48 * 1024 * 1024
    if "v6" in kind:
        # 128 MiB VMEM: plenty of headroom for 2x2 x 8 MiB buffers.
        return 8 * 1024 * 1024, 64 * 1024 * 1024
    # v5e (and unknown chips): 4 MiB blocks already put per-step overhead <4%.
    return 4 * 1024 * 1024, 32 * 1024 * 1024


def _num_tensorcores() -> int:
    """Best-effort TensorCore-per-device count (v7x=2); safe default 1."""
    try:
        dev = jax.devices()[0]
        for attr in ("num_cores", "num_tensorcores", "cores_per_chip"):
            n = getattr(dev, attr, None)
            if isinstance(n, int) and n > 0:
                return n
    except Exception:
        pass
    try:
        info = pltpu.get_tpu_info()
        for attr in ("num_cores", "tensorcore_count", "cores_per_chip"):
            n = getattr(info, attr, None)
            if isinstance(n, int) and n > 0:
                return n
    except Exception:
        pass
    return 1


def _pick_lane_width(aligned_size):
    """Largest lane width in {2048,...,128} dividing `aligned_size`."""
    for lanes in (2048, 1024, 512, 256, 128):
        if aligned_size % lanes == 0:
            return lanes
    return 128  # unreachable: aligned_size is a multiple of 128


# ------------------------------- main kernel -------------------------------


def _sstanh_2d(x2d, scale, *, block_bytes, vmem_limit, n_cores):
    m, lanes = x2d.shape
    itemsize = jnp.dtype(x2d.dtype).itemsize

    # dtype-native sublane pack: 8 rows f32, 16 bf16/f16, 32 int8/fp8.
    sub = 8 * max(1, 4 // itemsize)
    tm = max(sub, (block_bytes // (lanes * itemsize)) // sub * sub)

    # Give every TensorCore at least one grid step when the chip has >1 TC.
    if n_cores > 1 and m > sub:
        cap = max(sub, (m // n_cores) // sub * sub)
        tm = min(tm, cap)
    if tm >= m:
        tm = m  # full-extent block (valid even when m % sub != 0)
    grid_size = pl.cdiv(m, tm)

    # CORE_PARALLEL splits grid steps across TCs (the big v7x lever); fall back
    # to the always-safe "parallel" on single-core chips / uneven splits.
    if n_cores > 1 and grid_size % n_cores == 0:
        semantics = (pltpu.CORE_PARALLEL,)
    else:
        semantics = ("parallel",)

    size = m * lanes
    cost = pl.CostEstimate(
        flops=2 * size,                      # mul + add per element
        transcendentals=size,                # one tanh per element
        bytes_accessed=2 * size * itemsize,  # read x + write out
    )

    s = jnp.asarray(scale, dtype=jnp.float32).reshape((1,))

    return pl.pallas_call(
        _sstanh_kernel,
        out_shape=jax.ShapeDtypeStruct((m, lanes), x2d.dtype),
        grid=(grid_size,),
        in_specs=[
            pl.BlockSpec(memory_space=pltpu.SMEM),         # scale scalar
            pl.BlockSpec((tm, lanes), lambda i: (i, 0)),   # x tile
        ],
        out_specs=pl.BlockSpec((tm, lanes), lambda i: (i, 0)),
        compiler_params=pltpu.CompilerParams(
            dimension_semantics=semantics,
            vmem_limit_bytes=vmem_limit,
        ),
        cost_estimate=cost,
    )(s, x2d)


def self_scalable_tanh(x, scale):
    """x: any-shape float array; scale: f32 scalar (learned parameter)."""
    orig_shape = x.shape
    size = x.size
    if size == 0:
        return x

    block_bytes, vmem_limit = _block_bytes_and_vmem_limit()
    n_cores = _num_tensorcores()

    flat = x.reshape(-1)
    size_main = (size // 128) * 128

    if size_main == 0:
        # Tiny (<128 element) input: a kernel launch is pure overhead.
        t = jnp.tanh(flat)
        return (t + scale * t).astype(x.dtype).reshape(orig_shape)

    if size_main == size:
        # Common case: 128-aligned -> reshape is free, no pad/slice HBM passes.
        lanes = _pick_lane_width(size)
        out2d = _sstanh_2d(
            flat.reshape(size // lanes, lanes), scale,
            block_bytes=block_bytes, vmem_limit=vmem_limit, n_cores=n_cores)
        return out2d.reshape(orig_shape)

    # Ragged: kernel handles the 128-aligned prefix; the <128-element tail is
    # plain JAX (avoids full-array pad + slice round trips through HBM).
    lanes = _pick_lane_width(size_main)
    head2d = _sstanh_2d(
        flat[:size_main].reshape(size_main // lanes, lanes), scale,
        block_bytes=block_bytes, vmem_limit=vmem_limit, n_cores=n_cores)
    tail = flat[size_main:]
    t = jnp.tanh(tail)
    tail_out = (t + scale * t).astype(x.dtype)
    return jnp.concatenate([head2d.reshape(-1), tail_out]).reshape(orig_shape)


if __name__ == "__main__":
    key = jax.random.PRNGKey(0)
    B, C, H, W = 2, 4, 16, 16
    x = jax.random.normal(key, (B, C, H, W), dtype=jnp.float32)

    # Deterministic parameter init, matching nn.Parameter(torch.tensor(0.1)).
    init_scale = jnp.float32(0.1)

    fn = jax.jit(self_scalable_tanh)
    out = jax.block_until_ready(fn(x, init_scale))

    # Reference check (plain JAX, literal PyTorch formula).
    ref = jnp.tanh(x) + init_scale * jnp.tanh(x)
    assert out.shape == x.shape and out.dtype == x.dtype
    assert jnp.allclose(out, ref, atol=1e-6, rtol=1e-6)

    # Exercise the ragged (non-128-multiple) path too.
    y = jax.random.normal(jax.random.PRNGKey(1), (3, 5, 7), dtype=jnp.float32)
    out_y = jax.block_until_ready(jax.jit(self_scalable_tanh)(y, init_scale))
    ref_y = jnp.tanh(y) + init_scale * jnp.tanh(y)
    assert jnp.allclose(out_y, ref_y, atol=1e-6, rtol=1e-6)

    print("KERNEL_OK")
</pallas_src>

<mosaic_0001>
module attributes {stable_mosaic.version = 11 : i64} {
  func.func @_sstanh_kernel(%arg0: i32, %arg1: memref<1xf32, #tpu.memory_space<smem>>, %arg2: memref<1x2048xf32, #tpu.memory_space<vmem>>, %arg3: memref<1x2048xf32, #tpu.memory_space<vmem>>) attributes {dimension_semantics = [#tpu.dimension_semantics<parallel>], iteration_bounds = array<i64: 1>, scalar_prefetch = 0 : i64, scratch_operands = 0 : i64, tpu.core_type = #tpu.core_type<tc>, window_params = [{transform_indices = @transform_0, window_bounds = array<i64: 1>}, {transform_indices = @transform_1, window_bounds = array<i64: 1, 2048>}, {transform_indices = @transform_2, window_bounds = array<i64: 1, 2048>}]} {
    %c0 = arith.constant 0 : index
    %c0_0 = arith.constant 0 : index
    %0 = vector.load %arg2[%c0, %c0_0] : memref<1x2048xf32, #tpu.memory_space<vmem>>, vector<1x2048xf32>
    %1 = math.tanh %0 : vector<1x2048xf32>
    %c0_1 = arith.constant 0 : index
    %2 = memref.load %arg1[%c0_1] : memref<1xf32, #tpu.memory_space<smem>>
    %3 = vector.broadcast %2 : f32 to vector<1x2048xf32>
    %4 = arith.mulf %3, %1 : vector<1x2048xf32>
    %5 = arith.addf %1, %4 : vector<1x2048xf32>
    %c0_2 = arith.constant 0 : index
    %c0_3 = arith.constant 0 : index
    %6 = vector.load %arg3[%c0_2, %c0_3] : memref<1x2048xf32, #tpu.memory_space<vmem>>, vector<1x2048xf32>
    tpu.vector_store %arg3[%c0_2, %c0_3], %5 {strides = array<i32>} : memref<1x2048xf32, #tpu.memory_space<vmem>>, vector<1x2048xf32>,
    return
  }
  func.func @transform_0(%arg0: i32) -> i32 {
    %c0_i32 = arith.constant 0 : i32
    %c0_i32_0 = arith.constant 0 : i32
    return %c0_i32 : i32
  }
  func.func @transform_1(%arg0: i32) -> (i32, i32) {
    %c0_i32 = arith.constant 0 : i32
    %c0_i32_0 = arith.constant 0 : i32
    return %arg0, %c0_i32 : i32, i32
  }
  func.func @transform_2(%arg0: i32) -> (i32, i32) {
    %c0_i32 = arith.constant 0 : i32
    %c0_i32_0 = arith.constant 0 : i32
    return %arg0, %c0_i32 : i32, i32
  }
}

</mosaic_0001>

<llo_original>
// kernel: self_scalable_tanh.1
$region0: #{self_scalable_tanh.1}
  #allocation0 [shape = 'u32[]', space=smem, size = 0x4, offset = 0x4, fixed_abs, tag = 'smem constant byte address 0x4 - core index']
  #allocation1 [shape = 'u32[72,128]{1,0:T(1,128)}', space=vmem, size = 0x9000, scoped, tag = 'internal scratch']
  #allocation2 [shape = 'f32[1]{0:T(128)S(6)}', space=smem, size = 0x200, scoped, tag = 'scoped memory for self_scalable_tanh.1']
  %s0 = inlined_call_operand.<no memory space> [shape: f32[1], index: 0, kind: input, shape index: {}]
  %s1 = inlined_call_operand.vmem [shape: f32[1,2048], index: 1, kind: input, shape index: {}]
  %s2 = inlined_call_operand.vmem [shape: f32[1,2048], index: 2, kind: output, shape index: {}]
  %s3 = sld [smem:[#allocation0]]
  $region18: #{self_scalable_tanh.1} parent=0
    _
  %s5 = ssub.s32 1, %s3
  %s6 = scalar_select 0, %s5, %s3
  %7 = sst [smem:[#allocation2]] %s0
  // Predicated region
  $region2: #{self_scalable_tanh.1} parent=0 // pred_check
    _
  $region3: #{self_scalable_tanh.1} parent=0 // pred_check_branch
    %9 = sbr.rel (0) target = $region5
  $region4: #{self_scalable_tanh.1} parent=0 // pred_region
    _
  $region5: #{self_scalable_tanh.1} parent=0 // pred_fallthru
    _
  // Predicated region
  $region6: #{self_scalable_tanh.1} parent=0 // pred_check
    _
  $region7: #{self_scalable_tanh.1} parent=0 // pred_check_branch
    %11 = sbr.rel (0) target = $region9
  $region8: #{self_scalable_tanh.1} parent=0 // pred_region
    _
  $region9: #{self_scalable_tanh.1} parent=0 // pred_fallthru
    _
  %v12 = vld [vmem:[%s1] sm:$0xff]
  %v13 = vld [vmem:[%s1 + $0x8] sm:$0xff]
  %v14 = vtanh.pop %v12
  %v15 = vtanh.pop %v13
  %s16 = sld [smem:[#allocation2]]
  %v17 = vstv %s16
  %v18 = vmul.f32 %v17, %v14
  %v19 = vmul.f32 %v17, %v15
  %v20 = vadd.f32 %v14, %v18
  %v21 = vadd.f32 %v15, %v19
  %22 = vst [vmem:[%s2] sm:$0xff] %v20
  %23 = vst [vmem:[%s2 + $0x8] sm:$0xff] %v21
  // Predicated region
  $region10: #{self_scalable_tanh.1} parent=0 // pred_check
    _
  $region11: #{self_scalable_tanh.1} parent=0 // pred_check_branch
    %25 = sbr.rel (0) target = $region13
  $region12: #{self_scalable_tanh.1} parent=0 // pred_region
    _
  $region13: #{self_scalable_tanh.1} parent=0 // pred_fallthru
    _
  // Predicated region
  $region14: #{self_scalable_tanh.1} parent=0 // pred_check
    _
  $region15: #{self_scalable_tanh.1} parent=0 // pred_check_branch
    %27 = sbr.rel (0) target = $region17
  $region16: #{self_scalable_tanh.1} parent=0 // pred_region
    _
  $region17: #{self_scalable_tanh.1} parent=0 // pred_fallthru
    _

</llo_original>
